<compile_context>
chip_gen: v7x
topology: tpu7x:2x2x1
jax: 0.10.0
libtpu: 0.0.40
codegen_flags: <defaults>
</compile_context>

<pallas_src>
import functools

import jax
import jax.numpy as jnp
from jax.experimental import pallas as pl
from jax.experimental.pallas import tpu as pltpu


IN_DIM = 258
H1, H2, H3, OUT_DIM = 100, 40, 10, 3
PAD = 128                 # lane-dense padded width for every layer output
DEFAULT_TILE_B = 1024     # batch rows per grid step (sweepable)


def _mlp_kernel(x_ref,
                w1_ref, b1_ref,
                w2_ref, b2_ref,
                w3_ref, b3_ref,
                w4_ref, b4_ref,
                o_ref):
    # Layer 1: (TB, 258)bf16 @ (258, 128)bf16 -> f32 acc; bias + ReLU in f32.
    h = jnp.dot(x_ref[...], w1_ref[...], preferred_element_type=jnp.float32)
    h = jnp.maximum(h + b1_ref[...], 0.0).astype(jnp.bfloat16)
    # Layer 2: (TB, 128) @ (128, 128)
    h = jnp.dot(h, w2_ref[...], preferred_element_type=jnp.float32)
    h = jnp.maximum(h + b2_ref[...], 0.0).astype(jnp.bfloat16)
    # Layer 3: (TB, 128) @ (128, 128)
    h = jnp.dot(h, w3_ref[...], preferred_element_type=jnp.float32)
    h = jnp.maximum(h + b3_ref[...], 0.0).astype(jnp.bfloat16)
    # Layer 4 (no activation): (TB, 128) @ (128, 128) + bias
    out = jnp.dot(h, w4_ref[...], preferred_element_type=jnp.float32) + b4_ref[...]
    o_ref[...] = out.astype(o_ref.dtype)


def init_params(key):
    """Deterministic init mimicking nn.Linear's U(-1/sqrt(fan_in), 1/sqrt(fan_in)).

    Weights are (in_features, out_features) so the kernel computes x @ W + b,
    mathematically identical to PyTorch's x @ W.T + b with W of shape (out, in).
    """
    dims = [(IN_DIM, H1), (H1, H2), (H2, H3), (H3, OUT_DIM)]
    params = []
    for (fan_in, fan_out) in dims:
        key, kw, kb = jax.random.split(key, 3)
        bound = 1.0 / jnp.sqrt(float(fan_in))
        w = jax.random.uniform(kw, (fan_in, fan_out), jnp.float32, -bound, bound)
        b = jax.random.uniform(kb, (1, fan_out), jnp.float32, -bound, bound)
        params += [w, b]
    return tuple(params)


def prepare_params(params):
    """One-time param prep: zero-pad every layer output dim to 128 lanes and
    cast weights to bf16 (biases stay f32 for the f32 epilogue).

    Zero-padded biases guarantee the padded activation columns stay exactly 0
    through bias+ReLU, so the padded K-rows of later (zero-padded) weights
    never contribute and the first OUT_DIM output columns are bit-identical.
    """
    w1, b1, w2, b2, w3, b3, w4, b4 = params

    def pad_w(w, in_pad, out_pad):
        fi, fo = w.shape
        wp = jnp.zeros((in_pad, out_pad), jnp.float32).at[:fi, :fo].set(w)
        return wp.astype(jnp.bfloat16)

    def pad_b(b, out_pad):
        fo = b.shape[-1]
        return jnp.zeros((1, out_pad), jnp.float32).at[:, :fo].set(b.reshape(1, -1))

    return (pad_w(w1, IN_DIM, PAD), pad_b(b1, PAD),
            pad_w(w2, PAD, PAD),    pad_b(b2, PAD),
            pad_w(w3, PAD, PAD),    pad_b(b3, PAD),
            pad_w(w4, PAD, PAD),    pad_b(b4, PAD))


def _effective_tile(batch, tile_b):
    """Pick the per-step batch tile (multiple of 8).

    Small batches get a single tile covering the (8-rounded) batch; large
    batches get roughly-balanced tiles of at most tile_b rows, which also
    keeps >=2 grid steps so v7x's two TensorCores both get work.
    """
    b8 = -(-batch // 8) * 8
    if b8 <= tile_b:
        return b8
    n_steps = -(-b8 // tile_b)          # >= 2
    tile = -(-b8 // n_steps)
    return -(-tile // 8) * 8


@functools.partial(jax.jit, static_argnames=("tile_b",))
def spectrum2angles_forward(x, prepared_params, *, tile_b=DEFAULT_TILE_B):
    """x: (B, 258) float32 (any B >= 1). Returns (B, 3) float32."""
    w1, b1, w2, b2, w3, b3, w4, b4 = prepared_params
    B = x.shape[0]
    assert x.shape[1] == IN_DIM

    tile = _effective_tile(B, tile_b)
    n_steps = -(-B // tile)
    b_pad = n_steps * tile

    xb = x.astype(jnp.bfloat16)
    if b_pad != B:
        xb = jnp.pad(xb, ((0, b_pad - B), (0, 0)))

    def full_block(arr):
        # Full-array block, same block every grid step (stays resident in VMEM).
        nd = arr.ndim
        return pl.BlockSpec(arr.shape, lambda i: (0,) * nd)

    out = pl.pallas_call(
        _mlp_kernel,
        out_shape=jax.ShapeDtypeStruct((b_pad, PAD), jnp.float32),
        grid_spec=pltpu.PrefetchScalarGridSpec(
            num_scalar_prefetch=0,
            grid=(n_steps,),
            in_specs=[
                pl.BlockSpec((tile, IN_DIM), lambda i: (i, 0)),
                full_block(w1), full_block(b1),
                full_block(w2), full_block(b2),
                full_block(w3), full_block(b3),
                full_block(w4), full_block(b4),
            ],
            out_specs=pl.BlockSpec((tile, PAD), lambda i: (i, 0)),
        ),
        compiler_params=pltpu.CompilerParams(
            dimension_semantics=("parallel",)),
    )(xb, w1, b1, w2, b2, w3, b3, w4, b4)

    return out[:B, :OUT_DIM]


def reference_forward_bf16(x, params):
    """Pure-JAX reference mirroring the kernel's bf16-matmul / f32-accumulate math."""
    w1, b1, w2, b2, w3, b3, w4, b4 = params

    def layer(h, w, b, relu):
        y = jnp.dot(h, w.astype(jnp.bfloat16),
                    preferred_element_type=jnp.float32) + b
        if relu:
            y = jnp.maximum(y, 0.0).astype(jnp.bfloat16)
        return y

    h = layer(x.astype(jnp.bfloat16), w1, b1, True)
    h = layer(h, w2, b2, True)
    h = layer(h, w3, b3, True)
    return layer(h, w4, b4, False)


def reference_forward_f32(x, params):
    w1, b1, w2, b2, w3, b3, w4, b4 = params
    h = jnp.maximum(x @ w1 + b1, 0.0)
    h = jnp.maximum(h @ w2 + b2, 0.0)
    h = jnp.maximum(h @ w3 + b3, 0.0)
    return h @ w4 + b4


if __name__ == "__main__":
    key = jax.random.PRNGKey(0)
    key, kx = jax.random.split(key)

    B = 10  # small demo batch; NOT a multiple of 8 -> exercises the padding path
    x = jax.random.normal(kx, (B, IN_DIM), jnp.float32)

    params = init_params(key)
    prepared = prepare_params(params)

    out = spectrum2angles_forward(x, prepared)
    out = jax.block_until_ready(out)

    assert out.shape == (B, OUT_DIM)

    # Matches the bf16-matmul/f32-accumulate reference tightly...
    ref_bf16 = reference_forward_bf16(x, params)
    assert jnp.allclose(out, ref_bf16, atol=2e-3, rtol=2e-3), "mismatch vs bf16 reference"
    # ...and the pure-f32 reference within bf16 input-rounding tolerance.
    ref_f32 = reference_forward_f32(x, params)
    assert jnp.allclose(out, ref_f32, atol=5e-2, rtol=5e-2), "mismatch vs f32 reference"

    print("KERNEL_OK")
</pallas_src>

<mosaic_0001>
module attributes {stable_mosaic.version = 11 : i64} {
  func.func @_mlp_kernel(%arg0: i32, %arg1: memref<16x258xbf16, #tpu.memory_space<vmem>>, %arg2: memref<258x128xbf16, #tpu.memory_space<vmem>>, %arg3: memref<1x128xf32, #tpu.memory_space<vmem>>, %arg4: memref<128x128xbf16, #tpu.memory_space<vmem>>, %arg5: memref<1x128xf32, #tpu.memory_space<vmem>>, %arg6: memref<128x128xbf16, #tpu.memory_space<vmem>>, %arg7: memref<1x128xf32, #tpu.memory_space<vmem>>, %arg8: memref<128x128xbf16, #tpu.memory_space<vmem>>, %arg9: memref<1x128xf32, #tpu.memory_space<vmem>>, %arg10: memref<16x128xf32, #tpu.memory_space<vmem>>) attributes {dimension_semantics = [#tpu.dimension_semantics<parallel>], iteration_bounds = array<i64: 1>, scalar_prefetch = 0 : i64, scratch_operands = 0 : i64, tpu.core_type = #tpu.core_type<tc>, window_params = [{transform_indices = @transform_0, window_bounds = array<i64: 16, 258>}, {pipeline_mode = #tpu.pipeline_mode<synchronous>, transform_indices = @transform_1, window_bounds = array<i64: 258, 128>}, {pipeline_mode = #tpu.pipeline_mode<synchronous>, transform_indices = @transform_2, window_bounds = array<i64: 1, 128>}, {pipeline_mode = #tpu.pipeline_mode<synchronous>, transform_indices = @transform_3, window_bounds = array<i64: 128, 128>}, {pipeline_mode = #tpu.pipeline_mode<synchronous>, transform_indices = @transform_4, window_bounds = array<i64: 1, 128>}, {pipeline_mode = #tpu.pipeline_mode<synchronous>, transform_indices = @transform_5, window_bounds = array<i64: 128, 128>}, {pipeline_mode = #tpu.pipeline_mode<synchronous>, transform_indices = @transform_6, window_bounds = array<i64: 1, 128>}, {pipeline_mode = #tpu.pipeline_mode<synchronous>, transform_indices = @transform_7, window_bounds = array<i64: 128, 128>}, {pipeline_mode = #tpu.pipeline_mode<synchronous>, transform_indices = @transform_8, window_bounds = array<i64: 1, 128>}, {transform_indices = @transform_9, window_bounds = array<i64: 16, 128>}]} {
    %c0 = arith.constant 0 : index
    %c0_0 = arith.constant 0 : index
    %0 = vector.load %arg1[%c0, %c0_0] : memref<16x258xbf16, #tpu.memory_space<vmem>>, vector<16x258xbf16>
    %c0_1 = arith.constant 0 : index
    %c0_2 = arith.constant 0 : index
    %1 = vector.load %arg2[%c0_1, %c0_2] : memref<258x128xbf16, #tpu.memory_space<vmem>>, vector<258x128xbf16>
    %cst = arith.constant dense<0.000000e+00> : vector<16x128xf32>
    %2 = tpu.matmul %0, %1, %cst {dimension_numbers = #tpu.dot_dimension_numbers<[1], [0], [0], [1], [0, 0, 1, 1], [], []>} : vector<16x258xbf16>, vector<258x128xbf16>, vector<16x128xf32> -> vector<16x128xf32>
    %c0_3 = arith.constant 0 : index
    %c0_4 = arith.constant 0 : index
    %3 = vector.load %arg3[%c0_3, %c0_4] : memref<1x128xf32, #tpu.memory_space<vmem>>, vector<1x128xf32>
    %4 = vector.broadcast %3 : vector<1x128xf32> to vector<16x128xf32>
    %5 = arith.addf %2, %4 : vector<16x128xf32>
    %cst_5 = arith.constant 0.000000e+00 : f32
    %6 = vector.broadcast %cst_5 : f32 to vector<16x128xf32>
    %7 = arith.maximumf %5, %6 : vector<16x128xf32>
    %8 = arith.truncf %7 : vector<16x128xf32> to vector<16x128xbf16>
    %c0_6 = arith.constant 0 : index
    %c0_7 = arith.constant 0 : index
    %9 = vector.load %arg4[%c0_6, %c0_7] : memref<128x128xbf16, #tpu.memory_space<vmem>>, vector<128x128xbf16>
    %cst_8 = arith.constant dense<0.000000e+00> : vector<16x128xf32>
    %10 = tpu.matmul %8, %9, %cst_8 {dimension_numbers = #tpu.dot_dimension_numbers<[1], [0], [0], [1], [0, 0, 1, 1], [], []>} : vector<16x128xbf16>, vector<128x128xbf16>, vector<16x128xf32> -> vector<16x128xf32>
    %c0_9 = arith.constant 0 : index
    %c0_10 = arith.constant 0 : index
    %11 = vector.load %arg5[%c0_9, %c0_10] : memref<1x128xf32, #tpu.memory_space<vmem>>, vector<1x128xf32>
    %12 = vector.broadcast %11 : vector<1x128xf32> to vector<16x128xf32>
    %13 = arith.addf %10, %12 : vector<16x128xf32>
    %cst_11 = arith.constant 0.000000e+00 : f32
    %14 = vector.broadcast %cst_11 : f32 to vector<16x128xf32>
    %15 = arith.maximumf %13, %14 : vector<16x128xf32>
    %16 = arith.truncf %15 : vector<16x128xf32> to vector<16x128xbf16>
    %c0_12 = arith.constant 0 : index
    %c0_13 = arith.constant 0 : index
    %17 = vector.load %arg6[%c0_12, %c0_13] : memref<128x128xbf16, #tpu.memory_space<vmem>>, vector<128x128xbf16>
    %cst_14 = arith.constant dense<0.000000e+00> : vector<16x128xf32>
    %18 = tpu.matmul %16, %17, %cst_14 {dimension_numbers = #tpu.dot_dimension_numbers<[1], [0], [0], [1], [0, 0, 1, 1], [], []>} : vector<16x128xbf16>, vector<128x128xbf16>, vector<16x128xf32> -> vector<16x128xf32>
    %c0_15 = arith.constant 0 : index
    %c0_16 = arith.constant 0 : index
    %19 = vector.load %arg7[%c0_15, %c0_16] : memref<1x128xf32, #tpu.memory_space<vmem>>, vector<1x128xf32>
    %20 = vector.broadcast %19 : vector<1x128xf32> to vector<16x128xf32>
    %21 = arith.addf %18, %20 : vector<16x128xf32>
    %cst_17 = arith.constant 0.000000e+00 : f32
    %22 = vector.broadcast %cst_17 : f32 to vector<16x128xf32>
    %23 = arith.maximumf %21, %22 : vector<16x128xf32>
    %24 = arith.truncf %23 : vector<16x128xf32> to vector<16x128xbf16>
    %c0_18 = arith.constant 0 : index
    %c0_19 = arith.constant 0 : index
    %25 = vector.load %arg8[%c0_18, %c0_19] : memref<128x128xbf16, #tpu.memory_space<vmem>>, vector<128x128xbf16>
    %cst_20 = arith.constant dense<0.000000e+00> : vector<16x128xf32>
    %26 = tpu.matmul %24, %25, %cst_20 {dimension_numbers = #tpu.dot_dimension_numbers<[1], [0], [0], [1], [0, 0, 1, 1], [], []>} : vector<16x128xbf16>, vector<128x128xbf16>, vector<16x128xf32> -> vector<16x128xf32>
    %c0_21 = arith.constant 0 : index
    %c0_22 = arith.constant 0 : index
    %27 = vector.load %arg9[%c0_21, %c0_22] : memref<1x128xf32, #tpu.memory_space<vmem>>, vector<1x128xf32>
    %28 = vector.broadcast %27 : vector<1x128xf32> to vector<16x128xf32>
    %29 = arith.addf %26, %28 : vector<16x128xf32>
    %c0_23 = arith.constant 0 : index
    %c0_24 = arith.constant 0 : index
    %30 = vector.load %arg10[%c0_23, %c0_24] : memref<16x128xf32, #tpu.memory_space<vmem>>, vector<16x128xf32>
    tpu.vector_store %arg10[%c0_23, %c0_24], %29 {strides = array<i32>} : memref<16x128xf32, #tpu.memory_space<vmem>>, vector<16x128xf32>,
    return
  }
  func.func @transform_0(%arg0: i32) -> (i32, i32) {
    %c0_i32 = arith.constant 0 : i32
    %c0_i32_0 = arith.constant 0 : i32
    return %arg0, %c0_i32 : i32, i32
  }
  func.func @transform_1(%arg0: i32) -> (i32, i32) {
    %c0_i32 = arith.constant 0 : i32
    %c0_i32_0 = arith.constant 0 : i32
    %c0_i32_1 = arith.constant 0 : i32
    return %c0_i32, %c0_i32_0 : i32, i32
  }
  func.func @transform_2(%arg0: i32) -> (i32, i32) {
    %c0_i32 = arith.constant 0 : i32
    %c0_i32_0 = arith.constant 0 : i32
    %c0_i32_1 = arith.constant 0 : i32
    return %c0_i32, %c0_i32_0 : i32, i32
  }
  func.func @transform_3(%arg0: i32) -> (i32, i32) {
    %c0_i32 = arith.constant 0 : i32
    %c0_i32_0 = arith.constant 0 : i32
    %c0_i32_1 = arith.constant 0 : i32
    return %c0_i32, %c0_i32_0 : i32, i32
  }
  func.func @transform_4(%arg0: i32) -> (i32, i32) {
    %c0_i32 = arith.constant 0 : i32
    %c0_i32_0 = arith.constant 0 : i32
    %c0_i32_1 = arith.constant 0 : i32
    return %c0_i32, %c0_i32_0 : i32, i32
  }
  func.func @transform_5(%arg0: i32) -> (i32, i32) {
    %c0_i32 = arith.constant 0 : i32
    %c0_i32_0 = arith.constant 0 : i32
    %c0_i32_1 = arith.constant 0 : i32
    return %c0_i32, %c0_i32_0 : i32, i32
  }
  func.func @transform_6(%arg0: i32) -> (i32, i32) {
    %c0_i32 = arith.constant 0 : i32
    %c0_i32_0 = arith.constant 0 : i32
    %c0_i32_1 = arith.constant 0 : i32
    return %c0_i32, %c0_i32_0 : i32, i32
  }
  func.func @transform_7(%arg0: i32) -> (i32, i32) {
    %c0_i32 = arith.constant 0 : i32
    %c0_i32_0 = arith.constant 0 : i32
    %c0_i32_1 = arith.constant 0 : i32
    return %c0_i32, %c0_i32_0 : i32, i32
  }
  func.func @transform_8(%arg0: i32) -> (i32, i32) {
    %c0_i32 = arith.constant 0 : i32
    %c0_i32_0 = arith.constant 0 : i32
    %c0_i32_1 = arith.constant 0 : i32
    return %c0_i32, %c0_i32_0 : i32, i32
  }
  func.func @transform_9(%arg0: i32) -> (i32, i32) {
    %c0_i32 = arith.constant 0 : i32
    %c0_i32_0 = arith.constant 0 : i32
    return %arg0, %c0_i32 : i32, i32
  }
}

</mosaic_0001>

<llo_original>
// kernel: spectrum2angles_forward.1
$region0: #{spectrum2angles_forward.1}
  #allocation0 [shape = 'u32[]', space=smem, size = 0x4, offset = 0x4, fixed_abs, tag = 'smem constant byte address 0x4 - core index']
  #allocation1 [shape = 'u32[144,128]{1,0:T(1,128)}', space=vmem, size = 0x12000, scoped, tag = 'internal scratch']
  %s0 = inlined_call_operand.vmem [shape: bf16[16,258], index: 0, kind: input, shape index: {}]
  %s1 = inlined_call_operand.hbm [shape: bf16[258,128], index: 1, kind: input, shape index: {}]
  %s2 = inlined_call_operand.hbm [shape: f32[1,128], index: 2, kind: input, shape index: {}]
  %s3 = inlined_call_operand.vmem [shape: bf16[128,128], index: 3, kind: input, shape index: {}]
  %s4 = inlined_call_operand.vmem [shape: f32[1,128], index: 4, kind: input, shape index: {}]
  %s5 = inlined_call_operand.vmem [shape: bf16[128,128], index: 5, kind: input, shape index: {}]
  %s6 = inlined_call_operand.vmem [shape: f32[1,128], index: 6, kind: input, shape index: {}]
  %s7 = inlined_call_operand.hbm [shape: bf16[128,128], index: 7, kind: input, shape index: {}]
  %s8 = inlined_call_operand.vmem [shape: f32[1,128], index: 8, kind: input, shape index: {}]
  %s9 = inlined_call_operand.vmem [shape: f32[16,128], index: 9, kind: output, shape index: {}]
  %s10 = sld [smem:[#allocation0]]
  $region58: #{spectrum2angles_forward.1} parent=0
    _
  %s12 = ssub.s32 1, %s10
  %s13 = scalar_select 0, %s12, %s10
  $region1: #{spectrum2angles_forward.1} parent=0
    #allocation2 [shape = 'u8[67584]{0}', space=vmem, size = 0x10800, scoped, tag = 'input window, operand 1, single buffered']
    #allocation3 [shape = 's32[1]{0}', space=sflag, size = 0x4, scoped, tag = 'scoped memory for spectrum2angles_forward.1']
    #allocation4 [shape = 'u8[512]{0}', space=vmem, size = 0x400, scoped, tag = 'input window, operand 2, single buffered']
    #allocation5 [shape = 's32[1]{0}', space=sflag, size = 0x4, scoped, tag = 'scoped memory for spectrum2angles_forward.1']
    #allocation6 [shape = 'u8[32768]{0}', space=vmem, size = 0x8000, scoped, tag = 'input window, operand 7, single buffered']
    %14 = vsyncpa [#allocation3], 0
    %15 = vsyncpa [#allocation5], 0
    // Predicated region
    $region2: #{spectrum2angles_forward.1} parent=1 // pred_check
      _
    $region3: #{spectrum2angles_forward.1} parent=1 // pred_check_branch
      %17 = sbr.rel (0) target = $region5
    $region4: #{spectrum2angles_forward.1} parent=1 // pred_region
      _
    $region5: #{spectrum2angles_forward.1} parent=1 // pred_fallthru
      _
    // Predicated region
    $region6: #{spectrum2angles_forward.1} parent=1 // pred_check
      _
    $region7: #{spectrum2angles_forward.1} parent=1 // pred_check_branch
      %19 = sbr.rel (0) target = $region9
    $region8: #{spectrum2angles_forward.1} parent=1 // pred_region
      %s21 = ssub.s32 2112, 2112
      %22 = vsyncadd [#allocation3], %s21
      %s23 = sshll.u32 [#allocation2], 4
      %s24 = int_to_ptr.vmem [resolvable:$true] %s23
      %29 = dma.hbm_to_vmem [thread:$0]  %s1, 2112, %s24, [#allocation3], 64, 64, 4
    $region9: #{spectrum2angles_forward.1} parent=1 // pred_fallthru
      _
    // Predicated region
    $region10: #{spectrum2angles_forward.1} parent=1 // pred_check
      _
    $region11: #{spectrum2angles_forward.1} parent=1 // pred_check_branch
      %31 = sbr.rel (0) target = $region13
    $region12: #{spectrum2angles_forward.1} parent=1 // pred_region
      %s33 = ssub.s32 16, 16
      %34 = vsyncadd [#allocation5], %s33
      %s36 = sshll.u32 [#allocation4], 4
      %s37 = int_to_ptr.vmem [resolvable:$true] %s36
      %39 = dma.hbm_to_vmem [thread:$0]  %s2, 16, %s37, [#allocation5]
    $region13: #{spectrum2angles_forward.1} parent=1 // pred_fallthru
      _
    // Predicated region
    $region14: #{spectrum2angles_forward.1} parent=1 // pred_check
      _
    $region15: #{spectrum2angles_forward.1} parent=1 // pred_check_branch
      %41 = sbr.rel (0) target = $region17
    $region16: #{spectrum2angles_forward.1} parent=1 // pred_region
      _
    $region17: #{spectrum2angles_forward.1} parent=1 // pred_fallthru
      _
    // Predicated region
    $region18: #{spectrum2angles_forward.1} parent=1 // pred_check
      _
    $region19: #{spectrum2angles_forward.1} parent=1 // pred_check_branch
      %43 = sbr.rel (0) target = $region21
    $region20: #{spectrum2angles_forward.1} parent=1 // pred_region
      _
    $region21: #{spectrum2angles_forward.1} parent=1 // pred_fallthru
      _
    // Predicated region
    $region22: #{spectrum2angles_forward.1} parent=1 // pred_check
      _
    $region23: #{spectrum2angles_forward.1} parent=1 // pred_check_branch
      %45 = sbr.rel (0) target = $region25
    $region24: #{spectrum2angles_forward.1} parent=1 // pred_region
      _
    $region25: #{spectrum2angles_forward.1} parent=1 // pred_fallthru
      _
    // Predicated region
    $region26: #{spectrum2angles_forward.1} parent=1 // pred_check
      _
    $region27: #{spectrum2angles_forward.1} parent=1 // pred_check_branch
      %47 = sbr.rel (0) target = $region29
    $region28: #{spectrum2angles_forward.1} parent=1 // pred_region
      _
    $region29: #{spectrum2angles_forward.1} parent=1 // pred_fallthru
      _
    // Predicated region
    $region30: #{spectrum2angles_forward.1} parent=1 // pred_check
      _
    $region31: #{spectrum2angles_forward.1} parent=1 // pred_check_branch
      %49 = sbr.rel (0) target = $region33
    $region32: #{spectrum2angles_forward.1} parent=1 // pred_region
      %s51 = ssub.s32 1024, 1024
      %52 = vsyncadd [#allocation5], %s51
      %s53 = sshll.u32 [#allocation6], 4
      %s54 = int_to_ptr.vmem [resolvable:$true] %s53
      %59 = dma.hbm_to_vmem [thread:$0]  %s7, 1024, %s54, [#allocation5], 64, 64, 4
    $region33: #{spectrum2angles_forward.1} parent=1 // pred_fallthru
      _
    // Predicated region
    $region34: #{spectrum2angles_forward.1} parent=1 // pred_check
      _
    $region35: #{spectrum2angles_forward.1} parent=1 // pred_check_branch
      %61 = sbr.rel (0) target = $region37
    $region36: #{spectrum2angles_forward.1} parent=1 // pred_region
      _
    $region37: #{spectrum2angles_forward.1} parent=1 // pred_fallthru
      _
    // Predicated region
    $region38: #{spectrum2angles_forward.1} parent=1 // pred_check
      _
    $region39: #{spectrum2angles_forward.1} parent=1 // pred_check_branch
      %63 = sbr.rel (0) target = $region41
    $region40: #{spectrum2angles_forward.1} parent=1 // pred_region
      %64 = dma.done [#allocation3], 2112
    $region41: #{spectrum2angles_forward.1} parent=1 // pred_fallthru
      _
    // Predicated region
    $region42: #{spectrum2angles_forward.1} parent=1 // pred_check
      _
    $region43: #{spectrum2angles_forward.1} parent=1 // pred_check_branch
      %66 = sbr.rel (0) target = $region45
    $region44: #{spectrum2angles_forward.1} parent=1 // pred_region
      %67 = dma.done [#allocation5], 16
    $region45: #{spectrum2angles_forward.1} parent=1 // pred_fallthru
      _
    // Predicated region
    $region46: #{spectrum2angles_forward.1} parent=1 // pred_check
      _
    $region47: #{spectrum2angles_forward.1} parent=1 // pred_check_branch
      %69 = sbr.rel (0) target = $region49
    $region48: #{spectrum2angles_forward.1} parent=1 // pred_region
      %70 = dma.done [#allocation5], 1024
    $region49: #{spectrum2angles_forward.1} parent=1 // pred_fallthru
      _
    %v72 = vld [vmem:[%s0] sm:$0xff]
    %v73 = vld [vmem:[%s0 + $0x8] sm:$0xf]
    %v74 = vld [vmem:[%s0 + $0xc] sm:$0xff]
    %v75 = vld [vmem:[%s0 + $0x14] sm:$0xf]
    %v76 = vld [vmem:[#allocation2] sm:$0xf]
    %v77 = vld [vmem:[#allocation2 + $0x4] sm:$0xf]
    %v78 = vld [vmem:[#allocation2 + $0x8] sm:$0xf]
    %v79 = vld [vmem:[#allocation2 + $0xc] sm:$0xf]
    %v80 = vld [vmem:[#allocation2 + $0x10] sm:$0xf]
    %v81 = vld [vmem:[#allocation2 + $0x14] sm:$0xf]
    %v82 = vld [vmem:[#allocation2 + $0x18] sm:$0xf]
    %v83 = vld [vmem:[#allocation2 + $0x1c] sm:$0xf]
    %v84 = vld [vmem:[#allocation2 + $0x20] sm:$0xf]
    %v85 = vld [vmem:[#allocation2 + $0x24] sm:$0xf]
    %v86 = vld [vmem:[#allocation2 + $0x28] sm:$0xf]
    %v87 = vld [vmem:[#allocation2 + $0x2c] sm:$0xf]
    %v88 = vld [vmem:[#allocation2 + $0x30] sm:$0xf]
    %v89 = vld [vmem:[#allocation2 + $0x34] sm:$0xf]
    %v90 = vld [vmem:[#allocation2 + $0x38] sm:$0xf]
    %v91 = vld [vmem:[#allocation2 + $0x3c] sm:$0xf]
    %v92 = vld [vmem:[#allocation2 + $0x40] sm:$0xf]
    %v93 = vld [vmem:[#allocation2 + $0x44] sm:$0xf]
    %v94 = vld [vmem:[#allocation2 + $0x48] sm:$0xf]
    %v95 = vld [vmem:[#allocation2 + $0x4c] sm:$0xf]
    %v96 = vld [vmem:[#allocation2 + $0x50] sm:$0xf]
    %v97 = vld [vmem:[#allocation2 + $0x54] sm:$0xf]
    %v98 = vld [vmem:[#allocation2 + $0x58] sm:$0xf]
    %v99 = vld [vmem:[#allocation2 + $0x5c] sm:$0xf]
    %v100 = vld [vmem:[#allocation2 + $0x60] sm:$0xf]
    %v101 = vld [vmem:[#allocation2 + $0x64] sm:$0xf]
    %v102 = vld [vmem:[#allocation2 + $0x68] sm:$0xf]
    %v103 = vld [vmem:[#allocation2 + $0x6c] sm:$0xf]
    %v104 = vld [vmem:[#allocation2 + $0x70] sm:$0xf]
    %v105 = vld [vmem:[#allocation2 + $0x74] sm:$0xf]
    %v106 = vld [vmem:[#allocation2 + $0x78] sm:$0xf]
    %v107 = vld [vmem:[#allocation2 + $0x7c] sm:$0xf]
    %v108 = vld [vmem:[#allocation2 + $0x80] sm:$0x1]
    %v109 = vld [vmem:[#allocation4] sm:$0x1]
    %v111 = vlaneseq
    %v112 = vshrl.u32 %v111, 7
    %v113 = vsub.s32 0, %v112
    %v114 = vrot.slane %v109, %v113
    %v120 = vunpack.c.l.b16 %v72
    %v121 = vunpack.c.h.b16 %v72
    %v122 = vunpack.c.l.b16 %v73
    %v123 = vunpack.c.l.b16 %v74
    %v124 = vunpack.c.h.b16 %v74
    %v125 = vunpack.c.l.b16 %v75
    %v126 = vpack.c.b16 %v123, %v120
    %v127 = vpack.c.b16 %v124, %v121
    %v128 = vpack.c.b16 %v125, %v122
    %v164 = vunpack.c.l.b16 %v76
    %v165 = vunpack.c.l.b16 %v77
    %v166 = vunpack.c.l.b16 %v78
    %v167 = vunpack.c.l.b16 %v79
    %v168 = vunpack.c.l.b16 %v80
    %v169 = vunpack.c.l.b16 %v81
    %v170 = vunpack.c.l.b16 %v82
    %v171 = vunpack.c.l.b16 %v83
    %v172 = vunpack.c.l.b16 %v84
    %v173 = vunpack.c.l.b16 %v85
    %v174 = vunpack.c.l.b16 %v86
    %v175 = vunpack.c.l.b16 %v87
    %v176 = vunpack.c.l.b16 %v88
    %v177 = vunpack.c.l.b16 %v89
    %v178 = vunpack.c.l.b16 %v90
    %v179 = vunpack.c.l.b16 %v91
    %v180 = vunpack.c.l.b16 %v92
    %v181 = vunpack.c.l.b16 %v93
    %v182 = vunpack.c.l.b16 %v94
    %v183 = vunpack.c.l.b16 %v95
    %v184 = vunpack.c.l.b16 %v96
    %v185 = vunpack.c.l.b16 %v97
    %v186 = vunpack.c.l.b16 %v98
    %v187 = vunpack.c.l.b16 %v99
    %v188 = vunpack.c.l.b16 %v100
    %v189 = vunpack.c.l.b16 %v101
    %v190 = vunpack.c.l.b16 %v102
    %v191 = vunpack.c.l.b16 %v103
    %v192 = vunpack.c.l.b16 %v104
    %v193 = vunpack.c.l.b16 %v105
    %v194 = vunpack.c.l.b16 %v106
    %v195 = vunpack.c.l.b16 %v107
    %v196 = vunpack.c.l.b16 %v108
    %v197 = vpack.c.b16 %v165, %v164
    %v198 = vpack.c.b16 %v167, %v166
    %v199 = vpack.c.b16 %v169, %v168
    %v200 = vpack.c.b16 %v171, %v170
    %v201 = vpack.c.b16 %v173, %v172
    %v202 = vpack.c.b16 %v175, %v174
    %v203 = vpack.c.b16 %v177, %v176
    %v204 = vpack.c.b16 %v179, %v178
    %v205 = vpack.c.b16 %v181, %v180
    %v206 = vpack.c.b16 %v183, %v182
    %v207 = vpack.c.b16 %v185, %v184
    %v208 = vpack.c.b16 %v187, %v186
    %v209 = vpack.c.b16 %v189, %v188
    %v210 = vpack.c.b16 %v191, %v190
    %v211 = vpack.c.b16 %v193, %v192
    %v212 = vpack.c.b16 %v195, %v194
    %v213 = vpack.c.b16 %v196, %v196
    %vm230 = vcmask 15360
    %v232 = vsel %vm230, %v128, 0
    %vm234 = vcmask 1040384
    %v236 = vsel %vm234, %v213, 0
    %238 = vmatprep.subr.bf16.mxu0 0
    %239 = vmatpush1.bf16.msra.mxu0 %v197
    %240 = vmatprep.subr.bf16.mxu0 0
    %241 = vmatpush1.bf16.msra.mxu0 %v198
    %242 = vmatprep.subr.bf16.mxu0 0
    %243 = vmatpush1.bf16.msra.mxu0 %v199
    %244 = vmatprep.subr.bf16.mxu0 0
    %245 = vmatpush1.bf16.msra.mxu0 %v200
    %246 = vmatprep.subr.bf16.mxu0 0
    %247 = vmatpush1.bf16.msra.mxu0 %v201
    %248 = vmatprep.subr.bf16.mxu0 0
    %249 = vmatpush1.bf16.msra.mxu0 %v202
    %250 = vmatprep.subr.bf16.mxu0 0
    %251 = vmatpush1.bf16.msra.mxu0 %v203
    %252 = vmatprep.subr.bf16.mxu0 0
    %253 = vmatpush1.bf16.msra.mxu0 %v204
    %254 = vmatprep.subr.bf16.mxu0 0
    %255 = vmatpush1.bf16.msra.mxu0 %v205
    %256 = vmatprep.subr.bf16.mxu0 0
    %257 = vmatpush1.bf16.msra.mxu0 %v206
    %258 = vmatprep.subr.bf16.mxu0 0
    %259 = vmatpush1.bf16.msra.mxu0 %v207
    %260 = vmatprep.subr.bf16.mxu0 0
    %261 = vmatpush1.bf16.msra.mxu0 %v208
    %262 = vmatprep.subr.bf16.mxu0 0
    %263 = vmatpush1.bf16.msra.mxu0 %v209
    %264 = vmatprep.subr.bf16.mxu0 0
    %265 = vmatpush1.bf16.msra.mxu0 %v210
    %266 = vmatprep.subr.bf16.mxu0 0
    %267 = vmatpush1.bf16.msra.mxu0 %v211
    %268 = vmatprep.subr.bf16.mxu0 0
    %269 = vmatpush1.bf16.msra.mxu0 %v212
    %270 = vmatprep.mubr.bf16.mxu0 %v127
    %271 = vmatmul.mubr.bf16.gmra.mrb[0].mxu0 %v126
    %v272 = vpop.f32.mrb[0].mxu0
    %v273 = vadd.f32 %v114, %v272
    %v274 = vpop.f32.mrb[0].mxu0
    %v275 = vpop.f32.mrb[0].mxu0
    %v276 = vadd.f32 %v114, %v275
    %v277 = vpop.f32.mrb[0].mxu0
    %278 = vdwg.mxu0
    %279 = vmatprep.subr.bf16.mxu0 0
    %280 = vmatpush1.bf16.msra.mxu0 %v236
    %281 = vmatprep.subr.bf16.mxu0 0
    %282 = vmatpush1.bf16.msra.mxu0 0
    %283 = vmatprep.subr.bf16.mxu0 0
    %284 = vmatpush1.bf16.msra.mxu0 0
    %285 = vmatprep.subr.bf16.mxu0 0
    %286 = vmatpush1.bf16.msra.mxu0 0
    %287 = vmatprep.subr.bf16.mxu0 0
    %288 = vmatpush1.bf16.msra.mxu0 0
    %289 = vmatprep.subr.bf16.mxu0 0
    %290 = vmatpush1.bf16.msra.mxu0 0
    %291 = vmatprep.subr.bf16.mxu0 0
    %292 = vmatpush1.bf16.msra.mxu0 0
    %293 = vmatprep.subr.bf16.mxu0 0
    %294 = vmatpush1.bf16.msra.mxu0 0
    %295 = vmatprep.subr.bf16.mxu0 0
    %296 = vmatpush1.bf16.msra.mxu0 0
    %297 = vmatprep.subr.bf16.mxu0 0
    %298 = vmatpush1.bf16.msra.mxu0 0
    %299 = vmatprep.subr.bf16.mxu0 0
    %300 = vmatpush1.bf16.msra.mxu0 0
    %301 = vmatprep.subr.bf16.mxu0 0
    %302 = vmatpush1.bf16.msra.mxu0 0
    %303 = vmatprep.subr.bf16.mxu0 0
    %304 = vmatpush1.bf16.msra.mxu0 0
    %305 = vmatprep.subr.bf16.mxu0 0
    %306 = vmatpush1.bf16.msra.mxu0 0
    %307 = vmatprep.subr.bf16.mxu0 0
    %308 = vmatpush1.bf16.msra.mxu0 0
    %309 = vmatprep.subr.bf16.mxu0 0
    %310 = vmatpush1.bf16.msra.mxu0 0
    %311 = vmatprep.mubr.bf16.mxu0 0
    %312 = vmatmul.mubr.bf16.gmra.mrb[0].mxu0 %v232
    %v313 = vpop.f32.mrb[0].mxu0
    %v314 = vadd.f32 %v273, %v313
    %v315 = vpop.f32.mrb[0].mxu0
    %v316 = vpop.f32.mrb[0].mxu0
    %v317 = vadd.f32 %v276, %v316
    %v318 = vpop.f32.mrb[0].mxu0
    %319 = vdwg.mxu0
    %v320 = vmax.f32 %v314, 0.0
    %v321 = vmax.f32 %v317, 0.0
    %v322 = vpack.c.bf16 %v321, %v320
    %v323 = vld [vmem:[%s3] sm:$0xf]
    %v324 = vld [vmem:[%s3 + $0x4] sm:$0xf]
    %v325 = vld [vmem:[%s3 + $0x8] sm:$0xf]
    %v326 = vld [vmem:[%s3 + $0xc] sm:$0xf]
    %v327 = vld [vmem:[%s3 + $0x10] sm:$0xf]
    %v328 = vld [vmem:[%s3 + $0x14] sm:$0xf]
    %v329 = vld [vmem:[%s3 + $0x18] sm:$0xf]
    %v330 = vld [vmem:[%s3 + $0x1c] sm:$0xf]
    %v331 = vld [vmem:[%s3 + $0x20] sm:$0xf]
    %v332 = vld [vmem:[%s3 + $0x24] sm:$0xf]
    %v333 = vld [vmem:[%s3 + $0x28] sm:$0xf]
    %v334 = vld [vmem:[%s3 + $0x2c] sm:$0xf]
    %v335 = vld [vmem:[%s3 + $0x30] sm:$0xf]
    %v336 = vld [vmem:[%s3 + $0x34] sm:$0xf]
    %v337 = vld [vmem:[%s3 + $0x38] sm:$0xf]
    %v338 = vld [vmem:[%s3 + $0x3c] sm:$0xf]
    %v339 = vld [vmem:[%s4] sm:$0x1]
    %v341 = vlaneseq
    %v342 = vshrl.u32 %v341, 7
    %v343 = vsub.s32 0, %v342
    %v344 = vrot.slane %v339, %v343
    %v362 = vunpack.c.l.b16 %v323
    %v363 = vunpack.c.l.b16 %v324
    %v364 = vunpack.c.l.b16 %v325
    %v365 = vunpack.c.l.b16 %v326
    %v366 = vunpack.c.l.b16 %v327
    %v367 = vunpack.c.l.b16 %v328
    %v368 = vunpack.c.l.b16 %v329
    %v369 = vunpack.c.l.b16 %v330
    %v370 = vunpack.c.l.b16 %v331
    %v371 = vunpack.c.l.b16 %v332
    %v372 = vunpack.c.l.b16 %v333
    %v373 = vunpack.c.l.b16 %v334
    %v374 = vunpack.c.l.b16 %v335
    %v375 = vunpack.c.l.b16 %v336
    %v376 = vunpack.c.l.b16 %v337
    %v377 = vunpack.c.l.b16 %v338
    %v378 = vpack.c.b16 %v363, %v362
    %v379 = vpack.c.b16 %v365, %v364
    %v380 = vpack.c.b16 %v367, %v366
    %v381 = vpack.c.b16 %v369, %v368
    %v382 = vpack.c.b16 %v371, %v370
    %v383 = vpack.c.b16 %v373, %v372
    %v384 = vpack.c.b16 %v375, %v374
    %v385 = vpack.c.b16 %v377, %v376
    %394 = vmatprep.subr.bf16.mxu0 0
    %395 = vmatpush1.bf16.msra.mxu0 %v378
    %396 = vmatprep.subr.bf16.mxu0 0
    %397 = vmatpush1.bf16.msra.mxu0 %v379
    %398 = vmatprep.subr.bf16.mxu0 0
    %399 = vmatpush1.bf16.msra.mxu0 %v380
    %400 = vmatprep.subr.bf16.mxu0 0
    %401 = vmatpush1.bf16.msra.mxu0 %v381
    %402 = vmatprep.subr.bf16.mxu0 0
    %403 = vmatpush1.bf16.msra.mxu0 %v382
    %404 = vmatprep.subr.bf16.mxu0 0
    %405 = vmatpush1.bf16.msra.mxu0 %v383
    %406 = vmatprep.subr.bf16.mxu0 0
    %407 = vmatpush1.bf16.msra.mxu0 %v384
    %408 = vmatprep.subr.bf16.mxu0 0
    %409 = vmatpush1.bf16.msra.mxu0 %v385
    %410 = vmatprep.subr.bf16.mxu0 0
    %411 = vmatpush1.bf16.msra.mxu0 0
    %412 = vmatprep.subr.bf16.mxu0 0
    %413 = vmatpush1.bf16.msra.mxu0 0
    %414 = vmatprep.subr.bf16.mxu0 0
    %415 = vmatpush1.bf16.msra.mxu0 0
    %416 = vmatprep.subr.bf16.mxu0 0
    %417 = vmatpush1.bf16.msra.mxu0 0
    %418 = vmatprep.subr.bf16.mxu0 0
    %419 = vmatpush1.bf16.msra.mxu0 0
    %420 = vmatprep.subr.bf16.mxu0 0
    %421 = vmatpush1.bf16.msra.mxu0 0
    %422 = vmatprep.subr.bf16.mxu0 0
    %423 = vmatpush1.bf16.msra.mxu0 0
    %424 = vmatprep.subr.bf16.mxu0 0
    %425 = vmatpush1.bf16.msra.mxu0 0
    %426 = vmatprep.mubr.bf16.mxu0 0
    %427 = vmatmul.mubr.bf16.gmra.mrb[0].mxu0 %v322
    %v428 = vpop.f32.mrb[0].mxu0
    %v429 = vadd.f32 %v344, %v428
    %v430 = vpop.f32.mrb[0].mxu0
    %v431 = vpop.f32.mrb[0].mxu0
    %v432 = vadd.f32 %v344, %v431
    %v433 = vpop.f32.mrb[0].mxu0
    %434 = vdwg.mxu0
    %v435 = vmax.f32 %v429, 0.0
    %v436 = vmax.f32 %v432, 0.0
    %v437 = vpack.c.bf16 %v436, %v435
    %v438 = vld [vmem:[%s5] sm:$0xf]
    %v439 = vld [vmem:[%s5 + $0x4] sm:$0xf]
    %v440 = vld [vmem:[%s5 + $0x8] sm:$0xf]
    %v441 = vld [vmem:[%s5 + $0xc] sm:$0xf]
    %v442 = vld [vmem:[%s5 + $0x10] sm:$0xf]
    %v443 = vld [vmem:[%s5 + $0x14] sm:$0xf]
    %v444 = vld [vmem:[%s5 + $0x18] sm:$0xf]
    %v445 = vld [vmem:[%s5 + $0x1c] sm:$0xf]
    %v446 = vld [vmem:[%s5 + $0x20] sm:$0xf]
    %v447 = vld [vmem:[%s5 + $0x24] sm:$0xf]
    %v448 = vld [vmem:[%s5 + $0x28] sm:$0xf]
    %v449 = vld [vmem:[%s5 + $0x2c] sm:$0xf]
    %v450 = vld [vmem:[%s5 + $0x30] sm:$0xf]
    %v451 = vld [vmem:[%s5 + $0x34] sm:$0xf]
    %v452 = vld [vmem:[%s5 + $0x38] sm:$0xf]
    %v453 = vld [vmem:[%s5 + $0x3c] sm:$0xf]
    %v454 = vld [vmem:[%s6] sm:$0x1]
    %v456 = vlaneseq
    %v457 = vshrl.u32 %v456, 7
    %v458 = vsub.s32 0, %v457
    %v459 = vrot.slane %v454, %v458
    %v477 = vunpack.c.l.b16 %v438
    %v478 = vunpack.c.l.b16 %v439
    %v479 = vunpack.c.l.b16 %v440
    %v480 = vunpack.c.l.b16 %v441
    %v481 = vunpack.c.l.b16 %v442
    %v482 = vunpack.c.l.b16 %v443
    %v483 = vunpack.c.l.b16 %v444
    %v484 = vunpack.c.l.b16 %v445
    %v485 = vunpack.c.l.b16 %v446
    %v486 = vunpack.c.l.b16 %v447
    %v487 = vunpack.c.l.b16 %v448
    %v488 = vunpack.c.l.b16 %v449
    %v489 = vunpack.c.l.b16 %v450
    %v490 = vunpack.c.l.b16 %v451
    %v491 = vunpack.c.l.b16 %v452
    %v492 = vunpack.c.l.b16 %v453
    %v493 = vpack.c.b16 %v478, %v477
    %v494 = vpack.c.b16 %v480, %v479
    %v495 = vpack.c.b16 %v482, %v481
    %v496 = vpack.c.b16 %v484, %v483
    %v497 = vpack.c.b16 %v486, %v485
    %v498 = vpack.c.b16 %v488, %v487
    %v499 = vpack.c.b16 %v490, %v489
    %v500 = vpack.c.b16 %v492, %v491
    %509 = vmatprep.subr.bf16.mxu0 0
    %510 = vmatpush1.bf16.msra.mxu0 %v493
    %511 = vmatprep.subr.bf16.mxu0 0
    %512 = vmatpush1.bf16.msra.mxu0 %v494
    %513 = vmatprep.subr.bf16.mxu0 0
    %514 = vmatpush1.bf16.msra.mxu0 %v495
    %515 = vmatprep.subr.bf16.mxu0 0
    %516 = vmatpush1.bf16.msra.mxu0 %v496
    %517 = vmatprep.subr.bf16.mxu0 0
    %518 = vmatpush1.bf16.msra.mxu0 %v497
    %519 = vmatprep.subr.bf16.mxu0 0
    %520 = vmatpush1.bf16.msra.mxu0 %v498
    %521 = vmatprep.subr.bf16.mxu0 0
    %522 = vmatpush1.bf16.msra.mxu0 %v499
    %523 = vmatprep.subr.bf16.mxu0 0
    %524 = vmatpush1.bf16.msra.mxu0 %v500
    %525 = vmatprep.subr.bf16.mxu0 0
    %526 = vmatpush1.bf16.msra.mxu0 0
    %527 = vmatprep.subr.bf16.mxu0 0
    %528 = vmatpush1.bf16.msra.mxu0 0
    %529 = vmatprep.subr.bf16.mxu0 0
    %530 = vmatpush1.bf16.msra.mxu0 0
    %531 = vmatprep.subr.bf16.mxu0 0
    %532 = vmatpush1.bf16.msra.mxu0 0
    %533 = vmatprep.subr.bf16.mxu0 0
    %534 = vmatpush1.bf16.msra.mxu0 0
    %535 = vmatprep.subr.bf16.mxu0 0
    %536 = vmatpush1.bf16.msra.mxu0 0
    %537 = vmatprep.subr.bf16.mxu0 0
    %538 = vmatpush1.bf16.msra.mxu0 0
    %539 = vmatprep.subr.bf16.mxu0 0
    %540 = vmatpush1.bf16.msra.mxu0 0
    %541 = vmatprep.mubr.bf16.mxu0 0
    %542 = vmatmul.mubr.bf16.gmra.mrb[0].mxu0 %v437
    %v543 = vpop.f32.mrb[0].mxu0
    %v544 = vadd.f32 %v459, %v543
    %v545 = vpop.f32.mrb[0].mxu0
    %v546 = vpop.f32.mrb[0].mxu0
    %v547 = vadd.f32 %v459, %v546
    %v548 = vpop.f32.mrb[0].mxu0
    %549 = vdwg.mxu0
    %v550 = vmax.f32 %v544, 0.0
    %v551 = vmax.f32 %v547, 0.0
    %v552 = vpack.c.bf16 %v551, %v550
    %v553 = vld [vmem:[#allocation6] sm:$0xf]
    %v554 = vld [vmem:[#allocation6 + $0x4] sm:$0xf]
    %v555 = vld [vmem:[#allocation6 + $0x8] sm:$0xf]
    %v556 = vld [vmem:[#allocation6 + $0xc] sm:$0xf]
    %v557 = vld [vmem:[#allocation6 + $0x10] sm:$0xf]
    %v558 = vld [vmem:[#allocation6 + $0x14] sm:$0xf]
    %v559 = vld [vmem:[#allocation6 + $0x18] sm:$0xf]
    %v560 = vld [vmem:[#allocation6 + $0x1c] sm:$0xf]
    %v561 = vld [vmem:[#allocation6 + $0x20] sm:$0xf]
    %v562 = vld [vmem:[#allocation6 + $0x24] sm:$0xf]
    %v563 = vld [vmem:[#allocation6 + $0x28] sm:$0xf]
    %v564 = vld [vmem:[#allocation6 + $0x2c] sm:$0xf]
    %v565 = vld [vmem:[#allocation6 + $0x30] sm:$0xf]
    %v566 = vld [vmem:[#allocation6 + $0x34] sm:$0xf]
    %v567 = vld [vmem:[#allocation6 + $0x38] sm:$0xf]
    %v568 = vld [vmem:[#allocation6 + $0x3c] sm:$0xf]
    %v569 = vld [vmem:[%s8] sm:$0x1]
    %v571 = vlaneseq
    %v572 = vshrl.u32 %v571, 7
    %v573 = vsub.s32 0, %v572
    %v574 = vrot.slane %v569, %v573
    %v592 = vunpack.c.l.b16 %v553
    %v593 = vunpack.c.l.b16 %v554
    %v594 = vunpack.c.l.b16 %v555
    %v595 = vunpack.c.l.b16 %v556
    %v596 = vunpack.c.l.b16 %v557
    %v597 = vunpack.c.l.b16 %v558
    %v598 = vunpack.c.l.b16 %v559
    %v599 = vunpack.c.l.b16 %v560
    %v600 = vunpack.c.l.b16 %v561
    %v601 = vunpack.c.l.b16 %v562
    %v602 = vunpack.c.l.b16 %v563
    %v603 = vunpack.c.l.b16 %v564
    %v604 = vunpack.c.l.b16 %v565
    %v605 = vunpack.c.l.b16 %v566
    %v606 = vunpack.c.l.b16 %v567
    %v607 = vunpack.c.l.b16 %v568
    %v608 = vpack.c.b16 %v593, %v592
    %v609 = vpack.c.b16 %v595, %v594
    %v610 = vpack.c.b16 %v597, %v596
    %v611 = vpack.c.b16 %v599, %v598
    %v612 = vpack.c.b16 %v601, %v600
    %v613 = vpack.c.b16 %v603, %v602
    %v614 = vpack.c.b16 %v605, %v604
    %v615 = vpack.c.b16 %v607, %v606
    %624 = vmatprep.subr.bf16.mxu0 0
    %625 = vmatpush1.bf16.msra.mxu0 %v608
    %626 = vmatprep.subr.bf16.mxu0 0
    %627 = vmatpush1.bf16.msra.mxu0 %v609
    %628 = vmatprep.subr.bf16.mxu0 0
    %629 = vmatpush1.bf16.msra.mxu0 %v610
    %630 = vmatprep.subr.bf16.mxu0 0
    %631 = vmatpush1.bf16.msra.mxu0 %v611
    %632 = vmatprep.subr.bf16.mxu0 0
    %633 = vmatpush1.bf16.msra.mxu0 %v612
    %634 = vmatprep.subr.bf16.mxu0 0
    %635 = vmatpush1.bf16.msra.mxu0 %v613
    %636 = vmatprep.subr.bf16.mxu0 0
    %637 = vmatpush1.bf16.msra.mxu0 %v614
    %638 = vmatprep.subr.bf16.mxu0 0
    %639 = vmatpush1.bf16.msra.mxu0 %v615
    %640 = vmatprep.subr.bf16.mxu0 0
    %641 = vmatpush1.bf16.msra.mxu0 0
    %642 = vmatprep.subr.bf16.mxu0 0
    %643 = vmatpush1.bf16.msra.mxu0 0
    %644 = vmatprep.subr.bf16.mxu0 0
    %645 = vmatpush1.bf16.msra.mxu0 0
    %646 = vmatprep.subr.bf16.mxu0 0
    %647 = vmatpush1.bf16.msra.mxu0 0
    %648 = vmatprep.subr.bf16.mxu0 0
    %649 = vmatpush1.bf16.msra.mxu0 0
    %650 = vmatprep.subr.bf16.mxu0 0
    %651 = vmatpush1.bf16.msra.mxu0 0
    %652 = vmatprep.subr.bf16.mxu0 0
    %653 = vmatpush1.bf16.msra.mxu0 0
    %654 = vmatprep.subr.bf16.mxu0 0
    %655 = vmatpush1.bf16.msra.mxu0 0
    %656 = vmatprep.mubr.bf16.mxu0 0
    %657 = vmatmul.mubr.bf16.gmra.mrb[0].mxu0 %v552
    %v658 = vpop.f32.mrb[0].mxu0
    %v659 = vadd.f32 %v574, %v658
    %v660 = vpop.f32.mrb[0].mxu0
    %v661 = vpop.f32.mrb[0].mxu0
    %v662 = vadd.f32 %v574, %v661
    %v663 = vpop.f32.mrb[0].mxu0
    %664 = vdwg.mxu0
    %665 = vst [vmem:[%s9] sm:$0xff] %v659
    %666 = vst [vmem:[%s9 + $0x8] sm:$0xff] %v662
    // Predicated region
    $region50: #{spectrum2angles_forward.1} parent=1 // pred_check
      _
    $region51: #{spectrum2angles_forward.1} parent=1 // pred_check_branch
      %668 = sbr.rel (0) target = $region53
    $region52: #{spectrum2angles_forward.1} parent=1 // pred_region
      _
    $region53: #{spectrum2angles_forward.1} parent=1 // pred_fallthru
      _
    // Predicated region
    $region54: #{spectrum2angles_forward.1} parent=1 // pred_check
      _
    $region55: #{spectrum2angles_forward.1} parent=1 // pred_check_branch
      %670 = sbr.rel (0) target = $region57
    $region56: #{spectrum2angles_forward.1} parent=1 // pred_region
      _
    $region57: #{spectrum2angles_forward.1} parent=1 // pred_fallthru
      _
    %671 = vsyncpa [#allocation3], 1
    %672 = vsyncpa [#allocation5], 1

</llo_original>
